<compile_context>
chip_gen: v7x
topology: tpu7x:2x2x1
jax: 0.10.0
libtpu: 0.0.40
codegen_flags: <defaults>
</compile_context>

<pallas_src>
import jax
import jax.numpy as jnp
from jax import lax
from jax.experimental import pallas as pl
from jax.experimental.pallas import tpu as pltpu


# ----------------------------- kernel body ----------------------------------

def _transition_kernel(x_ref, scale_ref, shift_ref, w_ref, o_ref):
    # x_ref:     (NB, TH, W2, K)   NHWC tile with adjacent W pairs folded into
    #                              the lane axis: K = 2*Cin, W2 = W//2
    # scale_ref: (1, K)            folded BN scale (duplicated over the W fold)
    # shift_ref: (1, K)            folded BN shift (duplicated over the W fold)
    # w_ref:     (K, Cout)         stacked 1x1-conv weight [w; w] * 0.25
    # o_ref:     (NB, (TH//2)*W2, Cout)   flat, lane/sublane-dense output slab
    x = x_ref[...].astype(scale_ref.dtype)

    # BatchNorm (inference, pre-folded) + ReLU.
    h = jnp.maximum(x * scale_ref[...] + shift_ref[...], 0.0)

    nb, th, w2, k = h.shape
    cout = w_ref.shape[1]

    # 2x2 average pool, H-pair half: split only outer (row) dims -> layout-free.
    h = h.reshape(nb, th // 2, 2, w2, k)
    h_sum = h[:, :, 0] + h[:, :, 1]                       # (NB, TH//2, W2, K)

    # W-pair half and the 0.25 normalisation are already folded into w_ref.
    m = nb * (th // 2) * w2
    lhs = h_sum.reshape(m, k).astype(w_ref.dtype)

    # 1x1 conv (+ pooling) as one MXU contraction, fp32 accumulation.
    y = jnp.dot(lhs, w_ref[...], preferred_element_type=jnp.float32)

    # Split of the leading dim only -> layout-free; store is dense.
    o_ref[...] = y.reshape(nb, (th // 2) * w2, cout).astype(o_ref.dtype)


# ----------------------------- helpers ---------------------------------------

def _device_kind():
    try:
        return jax.devices()[0].device_kind.lower()
    except Exception:
        return ""


def _has_bf16_vpu():
    """True on chips with a native bf16 VPU path (v6e/v7x); False on v5e/older."""
    kind = _device_kind()
    if not kind:
        return False
    return not any(tag in kind for tag in ("v2", "v3", "v4", "v5e", "v5 lite", "v5lite"))


def _vmem_budget():
    """Per-generation (scoped-VMEM limit, per-tile byte budget)."""
    phys = None
    try:
        phys = getattr(pltpu.get_tpu_info(), "vmem_capacity_bytes", None)
    except Exception:
        phys = None
    if not phys:
        phys = 128 * 1024 * 1024            # v5e/v6e physical; v7x has 64 MiB
    vmem_limit = min(phys // 2, 64 * 1024 * 1024)   # 32 MiB on v7x, 64 MiB else
    # Double-buffered input + output tiles + weights/intermediates headroom.
    tile_budget = vmem_limit // 4                   # ~8 MiB v7x, ~16 MiB v5e/v6e
    return vmem_limit, tile_budget


def _pick_tiles(N, H, bytes_per_row, budget_bytes, min_steps=2):
    """Pick (NB, TH): the largest tile that fits the VMEM budget while keeping
    at least `min_steps` (ideally an even number of) total grid steps so v7x's
    two TensorCores both get work.  Falls back to the minimal (1, 2) tile."""
    best, best_key = (1, 2), None
    for nb in range(1, N + 1):
        if N % nb:
            continue
        for th in range(2, H + 1, 2):
            if H % th:
                continue
            rows = nb * th
            if rows * bytes_per_row > budget_bytes:
                continue
            steps = (N // nb) * (H // th)
            # (enough steps, bigger tile, even step count, more contiguous DMA)
            key = (steps >= min_steps, rows, steps % 2 == 0, th)
            if best_key is None or key > best_key:
                best, best_key = (nb, th), key
    return best


# ----------------------------- entry points ----------------------------------

def transition_forward_nhwc(x_nhwc, gamma, beta, running_mean, running_var,
                            conv_w, eps=1e-5, matmul_dtype=jnp.bfloat16,
                            block_n=None, block_h=None):
    """Fused BN(inference) -> ReLU -> 1x1 conv -> AvgPool2d(2,2), NHWC in/out.

    x_nhwc: (N, H, W, Cin); conv_w: (Cout, Cin) or (Cout, Cin, 1, 1).
    Returns (N, H//2, W//2, Cout) in x_nhwc.dtype.
    """
    N, H, W, Cin = x_nhwc.shape
    assert H % 2 == 0 and W % 2 == 0
    W2 = W // 2
    K = 2 * Cin
    conv_w2d = conv_w.reshape(conv_w.shape[0], -1)
    Cout = conv_w2d.shape[0]
    assert conv_w2d.shape[1] == Cin

    # ---- glue (cheap, contiguous HBM reshapes / tiny per-channel vectors) ---
    # Elementwise compute dtype: bf16 on bf16-VPU chips when the input is bf16,
    # fp32 otherwise (v5e has no bf16 VPU path).
    compute_dtype = jnp.float32
    if x_nhwc.dtype == jnp.bfloat16 and _has_bf16_vpu():
        compute_dtype = jnp.bfloat16

    scale = (gamma / jnp.sqrt(running_var + eps)).astype(jnp.float32)
    shift = (beta - running_mean * scale).astype(jnp.float32)
    # Duplicate over the folded W-pair axis: index k = w_parity*Cin + c.
    scale2 = jnp.concatenate([scale, scale]).reshape(1, K).astype(compute_dtype)
    shift2 = jnp.concatenate([shift, shift]).reshape(1, K).astype(compute_dtype)

    # Fold adjacent W pairs into the lane/contraction axis: contiguous, free.
    x_folded = x_nhwc.reshape(N, H, W2, K)

    # Stacked 1x1-conv weight [w; w], pre-scaled by the 2x2 avg-pool factor.
    wt = jnp.transpose(conv_w2d, (1, 0)).astype(jnp.float32)        # (Cin, Cout)
    w2 = (jnp.concatenate([wt, wt], axis=0) * 0.25).astype(matmul_dtype)  # (K, Cout)

    # ---- tiling --------------------------------------------------------------
    vmem_limit, tile_budget = _vmem_budget()
    in_item = jnp.dtype(x_nhwc.dtype).itemsize
    out_item = jnp.dtype(x_nhwc.dtype).itemsize
    bytes_per_row = W2 * K * in_item + (W2 * Cout * out_item) // 2
    nb_auto, th_auto = _pick_tiles(N, H, bytes_per_row, tile_budget)
    nb = block_n if block_n is not None else nb_auto
    th = block_h if block_h is not None else th_auto
    assert N % nb == 0 and H % th == 0 and th % 2 == 0

    grid = (N // nb, H // th)
    m_out = (H // 2) * W2                      # flat pooled-spatial per image
    m_tile = (th // 2) * W2

    flops = 2 * N * m_out * K * Cout
    bytes_accessed = (N * H * W2 * K * in_item
                      + N * m_out * Cout * out_item
                      + K * Cout * jnp.dtype(matmul_dtype).itemsize
                      + 2 * K * jnp.dtype(compute_dtype).itemsize)

    out_flat = pl.pallas_call(
        _transition_kernel,
        out_shape=jax.ShapeDtypeStruct((N, m_out, Cout), x_nhwc.dtype),
        grid_spec=pltpu.PrefetchScalarGridSpec(
            num_scalar_prefetch=0,
            grid=grid,
            in_specs=[
                pl.BlockSpec((nb, th, W2, K), lambda n, t: (n, t, 0, 0)),
                pl.BlockSpec((1, K), lambda n, t: (0, 0)),
                pl.BlockSpec((1, K), lambda n, t: (0, 0)),
                pl.BlockSpec((K, Cout), lambda n, t: (0, 0)),
            ],
            out_specs=pl.BlockSpec((nb, m_tile, Cout), lambda n, t: (n, t, 0)),
        ),
        compiler_params=pltpu.CompilerParams(
            dimension_semantics=("parallel", "parallel"),
            vmem_limit_bytes=vmem_limit,
        ),
        cost_estimate=pl.CostEstimate(flops=flops, transcendentals=0,
                                      bytes_accessed=bytes_accessed),
    )(x_folded, scale2, shift2, w2)

    # Free contiguous reshape back to the 4-D NHWC view.
    return out_flat.reshape(N, H // 2, W2, Cout)


def transition_forward(x_nchw, gamma, beta, running_mean, running_var, conv_w,
                       eps=1e-5, matmul_dtype=jnp.bfloat16,
                       block_n=None, block_h=None):
    """NCHW wrapper matching the PyTorch module signature.

    TODO(synk): drop these two transposes by keeping the model NHWC and calling
    transition_forward_nhwc directly (they cost more HBM traffic than the kernel).
    """
    x = jnp.transpose(x_nchw, (0, 2, 3, 1))                         # NHWC
    out_nhwc = transition_forward_nhwc(x, gamma, beta, running_mean, running_var,
                                       conv_w, eps=eps, matmul_dtype=matmul_dtype,
                                       block_n=block_n, block_h=block_h)
    return jnp.transpose(out_nhwc, (0, 3, 1, 2))                    # back to NCHW


# ----------------------------- reference & test -------------------------------

def _reference(x_nchw, gamma, beta, mean, var, conv_w, eps=1e-5):
    # Pure-JAX reference mirroring the PyTorch forward (inference-mode BN).
    x = (x_nchw - mean[None, :, None, None]) / jnp.sqrt(var[None, :, None, None] + eps)
    x = x * gamma[None, :, None, None] + beta[None, :, None, None]
    x = jnp.maximum(x, 0.0)
    w2d = conv_w.reshape(conv_w.shape[0], -1)
    y = jnp.einsum("nchw,oc->nohw", x, w2d, precision=lax.Precision.HIGHEST)
    N, C, H, W = y.shape
    y = y.reshape(N, C, H // 2, 2, W // 2, 2).mean(axis=(3, 5))
    return y


if __name__ == "__main__":
    key = jax.random.PRNGKey(0)
    N, Cin, H, W = 2, 4, 16, 16
    Cout = 2  # DenseNet-style transition (out = in // 2)

    k1, k2, k3, k4, k5, k6 = jax.random.split(key, 6)
    x = jax.random.normal(k1, (N, Cin, H, W), dtype=jnp.float32)
    gamma = jax.random.normal(k2, (Cin,), dtype=jnp.float32) * 0.1 + 1.0
    beta = jax.random.normal(k3, (Cin,), dtype=jnp.float32) * 0.1
    running_mean = jax.random.normal(k4, (Cin,), dtype=jnp.float32) * 0.1
    running_var = jnp.abs(jax.random.normal(k5, (Cin,), dtype=jnp.float32)) * 0.1 + 1.0
    conv_w = jax.random.normal(k6, (Cout, Cin), dtype=jnp.float32) * 0.3

    ref = _reference(x, gamma, beta, running_mean, running_var, conv_w)

    # 1) Default path: bf16 MXU operands, auto-picked tiles (grid = (2, 1) here,
    #    2 even steps so both v7x TensorCores get work).
    out = transition_forward(x, gamma, beta, running_mean, running_var, conv_w)
    out = jax.block_until_ready(out)
    assert out.shape == (N, Cout, H // 2, W // 2), out.shape
    assert jnp.allclose(out, ref, atol=5e-2, rtol=5e-2), float(jnp.max(jnp.abs(out - ref)))

    # 2) fp32-matmul path with an explicit smaller spatial tile (grid = (2, 2)),
    #    exercising the multi-tile pipeline; tight tolerance (all-fp32 math).
    out32 = transition_forward(x, gamma, beta, running_mean, running_var, conv_w,
                               matmul_dtype=jnp.float32, block_h=8)
    out32 = jax.block_until_ready(out32)
    assert out32.shape == (N, Cout, H // 2, W // 2), out32.shape
    assert jnp.allclose(out32, ref, atol=1e-3, rtol=1e-3), float(jnp.max(jnp.abs(out32 - ref)))

    # 3) Batch-block path: NB=2 folded into the matmul M (grid = (1, 4)).
    outnb = transition_forward(x, gamma, beta, running_mean, running_var, conv_w,
                               matmul_dtype=jnp.float32, block_n=2, block_h=4)
    outnb = jax.block_until_ready(outnb)
    assert outnb.shape == (N, Cout, H // 2, W // 2), outnb.shape
    assert jnp.allclose(outnb, ref, atol=1e-3, rtol=1e-3), float(jnp.max(jnp.abs(outnb - ref)))

    print("KERNEL_OK")
</pallas_src>

<mosaic_0001>
module attributes {stable_mosaic.version = 11 : i64} {
  func.func @_transition_kernel(%arg0: i32, %arg1: i32, %arg2: memref<1x16x8x8xf32, #tpu.memory_space<vmem>>, %arg3: memref<1x8xf32, #tpu.memory_space<vmem>>, %arg4: memref<1x8xf32, #tpu.memory_space<vmem>>, %arg5: memref<8x2xbf16, #tpu.memory_space<vmem>>, %arg6: memref<1x64x2xf32, #tpu.memory_space<vmem>>) attributes {dimension_semantics = [#tpu.dimension_semantics<parallel>, #tpu.dimension_semantics<parallel>], iteration_bounds = array<i64: 2, 1>, scalar_prefetch = 0 : i64, scratch_operands = 0 : i64, tpu.core_type = #tpu.core_type<tc>, window_params = [{transform_indices = @transform_0, window_bounds = array<i64: 1, 16, 8, 8>}, {pipeline_mode = #tpu.pipeline_mode<synchronous>, transform_indices = @transform_1, window_bounds = array<i64: 1, 8>}, {pipeline_mode = #tpu.pipeline_mode<synchronous>, transform_indices = @transform_2, window_bounds = array<i64: 1, 8>}, {pipeline_mode = #tpu.pipeline_mode<synchronous>, transform_indices = @transform_3, window_bounds = array<i64: 8, 2>}, {transform_indices = @transform_4, window_bounds = array<i64: 1, 64, 2>}]} {
    %c0 = arith.constant 0 : index
    %c0_0 = arith.constant 0 : index
    %c0_1 = arith.constant 0 : index
    %c0_2 = arith.constant 0 : index
    %0 = vector.load %arg2[%c0, %c0_0, %c0_1, %c0_2] : memref<1x16x8x8xf32, #tpu.memory_space<vmem>>, vector<1x16x8x8xf32>
    %c0_3 = arith.constant 0 : index
    %c0_4 = arith.constant 0 : index
    %1 = vector.load %arg3[%c0_3, %c0_4] : memref<1x8xf32, #tpu.memory_space<vmem>>, vector<1x8xf32>
    %2 = vector.shape_cast %1 : vector<1x8xf32> to vector<1x1x1x8xf32>
    %3 = vector.broadcast %2 : vector<1x1x1x8xf32> to vector<1x16x8x8xf32>
    %4 = arith.mulf %0, %3 : vector<1x16x8x8xf32>
    %c0_5 = arith.constant 0 : index
    %c0_6 = arith.constant 0 : index
    %5 = vector.load %arg4[%c0_5, %c0_6] : memref<1x8xf32, #tpu.memory_space<vmem>>, vector<1x8xf32>
    %6 = vector.shape_cast %5 : vector<1x8xf32> to vector<1x1x1x8xf32>
    %7 = vector.broadcast %6 : vector<1x1x1x8xf32> to vector<1x16x8x8xf32>
    %8 = arith.addf %4, %7 : vector<1x16x8x8xf32>
    %cst = arith.constant 0.000000e+00 : f32
    %9 = vector.broadcast %cst : f32 to vector<1x16x8x8xf32>
    %10 = arith.maximumf %8, %9 : vector<1x16x8x8xf32>
    %11 = vector.shape_cast %10 : vector<1x16x8x8xf32> to vector<1x8x2x8x8xf32>
    %12 = vector.extract_strided_slice %11 {offsets = [0, 0, 0, 0, 0], sizes = [1, 8, 1, 8, 8], strides = [1, 1, 1, 1, 1]} : vector<1x8x2x8x8xf32> to vector<1x8x1x8x8xf32>
    %13 = vector.shape_cast %12 : vector<1x8x1x8x8xf32> to vector<1x8x8x8xf32>
    %14 = vector.extract_strided_slice %11 {offsets = [0, 0, 1, 0, 0], sizes = [1, 8, 1, 8, 8], strides = [1, 1, 1, 1, 1]} : vector<1x8x2x8x8xf32> to vector<1x8x1x8x8xf32>
    %15 = vector.shape_cast %14 : vector<1x8x1x8x8xf32> to vector<1x8x8x8xf32>
    %16 = arith.addf %13, %15 : vector<1x8x8x8xf32>
    %17 = vector.shape_cast %16 : vector<1x8x8x8xf32> to vector<64x8xf32>
    %18 = arith.truncf %17 : vector<64x8xf32> to vector<64x8xbf16>
    %c0_7 = arith.constant 0 : index
    %c0_8 = arith.constant 0 : index
    %19 = vector.load %arg5[%c0_7, %c0_8] : memref<8x2xbf16, #tpu.memory_space<vmem>>, vector<8x2xbf16>
    %cst_9 = arith.constant dense<0.000000e+00> : vector<64x2xf32>
    %20 = tpu.matmul %18, %19, %cst_9 {dimension_numbers = #tpu.dot_dimension_numbers<[1], [0], [0], [1], [0, 0, 1, 1], [], []>} : vector<64x8xbf16>, vector<8x2xbf16>, vector<64x2xf32> -> vector<64x2xf32>
    %21 = vector.shape_cast %20 : vector<64x2xf32> to vector<1x64x2xf32>
    %c0_10 = arith.constant 0 : index
    %c0_11 = arith.constant 0 : index
    %c0_12 = arith.constant 0 : index
    %22 = vector.load %arg6[%c0_10, %c0_11, %c0_12] : memref<1x64x2xf32, #tpu.memory_space<vmem>>, vector<1x64x2xf32>
    tpu.vector_store %arg6[%c0_10, %c0_11, %c0_12], %21 {strides = array<i32>} : memref<1x64x2xf32, #tpu.memory_space<vmem>>, vector<1x64x2xf32>,
    return
  }
  func.func @transform_0(%arg0: i32, %arg1: i32) -> (i32, i32, i32, i32) {
    %c0_i32 = arith.constant 0 : i32
    %c0_i32_0 = arith.constant 0 : i32
    %c0_i32_1 = arith.constant 0 : i32
    return %arg0, %arg1, %c0_i32, %c0_i32_0 : i32, i32, i32, i32
  }
  func.func @transform_1(%arg0: i32, %arg1: i32) -> (i32, i32) {
    %c0_i32 = arith.constant 0 : i32
    %c0_i32_0 = arith.constant 0 : i32
    %c0_i32_1 = arith.constant 0 : i32
    return %c0_i32, %c0_i32_0 : i32, i32
  }
  func.func @transform_2(%arg0: i32, %arg1: i32) -> (i32, i32) {
    %c0_i32 = arith.constant 0 : i32
    %c0_i32_0 = arith.constant 0 : i32
    %c0_i32_1 = arith.constant 0 : i32
    return %c0_i32, %c0_i32_0 : i32, i32
  }
  func.func @transform_3(%arg0: i32, %arg1: i32) -> (i32, i32) {
    %c0_i32 = arith.constant 0 : i32
    %c0_i32_0 = arith.constant 0 : i32
    %c0_i32_1 = arith.constant 0 : i32
    return %c0_i32, %c0_i32_0 : i32, i32
  }
  func.func @transform_4(%arg0: i32, %arg1: i32) -> (i32, i32, i32) {
    %c0_i32 = arith.constant 0 : i32
    %c0_i32_0 = arith.constant 0 : i32
    return %arg0, %arg1, %c0_i32 : i32, i32, i32
  }
}

</mosaic_0001>

<llo_original>
// kernel: tpu_custom_call.1
$region0: #{tpu_custom_call.1}
  #allocation0 [shape = 'u32[]', space=smem, size = 0x4, offset = 0x4, fixed_abs, tag = 'smem constant byte address 0x4 - core index']
  #allocation1 [shape = 'u32[144,128]{1,0:T(1,128)}', space=vmem, size = 0x12000, scoped, tag = 'internal scratch']
  %s0 = inlined_call_operand.hbm [shape: f32[2,16,8,8], index: 0, kind: input, shape index: {}]
  %s1 = inlined_call_operand.hbm [shape: f32[1,8], index: 1, kind: input, shape index: {}]
  %s2 = inlined_call_operand.hbm [shape: f32[1,8], index: 2, kind: input, shape index: {}]
  %s3 = inlined_call_operand.hbm [shape: bf16[8,2], index: 3, kind: input, shape index: {}]
  %s4 = inlined_call_operand.hbm [shape: f32[2,64,2], index: 4, kind: output, shape index: {}]
  %s5 = sld [smem:[#allocation0]]
  $region65: #{tpu_custom_call.1} parent=0
    _
  %s7 = ssub.s32 1, %s5
  %s8 = scalar_select 0, %s7, %s5
  $region1: #{tpu_custom_call.1} parent=0
    #allocation2 [shape = 'u8[131072]{0}', space=vmem, size = 0x20000, scoped, tag = 'input window, operand 0']
    #allocation3 [shape = 's32[2]{0}', space=sflag, size = 0x8, scoped, tag = 'scoped memory for tpu_custom_call.1']
    #allocation4 [shape = 's32[2]{0}', space=sflag, size = 0x8, scoped, tag = 'scoped memory for tpu_custom_call.1']
    #allocation5 [shape = 'u8[512]{0}', space=vmem, size = 0x400, scoped, tag = 'input window, operand 1, single buffered']
    #allocation6 [shape = 's32[1]{0}', space=sflag, size = 0x4, scoped, tag = 'scoped memory for tpu_custom_call.1']
    #allocation7 [shape = 'u8[512]{0}', space=vmem, size = 0x400, scoped, tag = 'input window, operand 2, single buffered']
    #allocation8 [shape = 'u8[2048]{0}', space=vmem, size = 0x800, scoped, tag = 'input window, operand 3, single buffered']
    #allocation9 [shape = 's32[1]{0}', space=sflag, size = 0x4, scoped, tag = 'scoped memory for tpu_custom_call.1']
    #allocation10 [shape = 'u8[65536]{0}', space=vmem, size = 0x10000, scoped, tag = 'output window, operand 0']
    %9 = vsyncpa [#allocation3], 0
    %s10 = scalar_lea.sflag [#allocation3], 1
    %11 = vsyncpa %s10, 0
    %12 = vsyncpa [#allocation6], 0
    %13 = vsyncpa [#allocation9], 0
    %14 = vsyncpa [#allocation4], 0
    %s15 = scalar_lea.sflag [#allocation4], 1
    %16 = vsyncpa %s15, 0
    loop: start=0, step=1, limit=4
    $region2: #{tpu_custom_call.1} parent=1 // loop_pre_header
      _
    $region3: #{tpu_custom_call.1} parent=1 // loop_header
      %s18 = sphi 0, %s22
      %p19 = scmp.ge.s32.totalorder %s18, 4
      %s25 = sphi 0, %s37
      %s26 = sphi 0, %s33
      %s27 = sphi 0, %s25
      %s28 = sphi 0, %s26
      %s29 = sphi 0, %s27
      %s30 = sphi 0, %s28
      %s42 = sphi 0, %s44
      %s45 = sphi 0, %s42
      %s46 = sphi 0, %s45
      %s62 = sphi 0, %s46
      %s66 = sphi 0, %s66
      %s68 = sphi 0, %s66
      %s69 = sphi 0, %s68
      %s83 = sphi 0, %s69
      %s87 = sphi 0, %s87
      %s89 = sphi 0, %s87
      %s90 = sphi 0, %s89
      %s104 = sphi 0, %s90
      %s108 = sphi 0, %s108
      %s110 = sphi 0, %s108
      %s111 = sphi 0, %s110
      %s125 = sphi 0, %s111
      %s133 = sphi 0, %s135
      %s136 = sphi 0, %s133
      %s137 = sphi 0, %s136
      %s153 = sphi 0, %s137
    $region4: #{tpu_custom_call.1} parent=1 // loop_header_branch
      %21 = sbr.rel (%p19) target = $region8
    $region5: #{tpu_custom_call.1} parent=1 // loop_body
      %s23 = ssub.s32 %s18, 1
      %s24 = ssub.s32 %s18, 2
      %s31 = sadd.s32 1, %s26
      %p32 = scmp.ge.s32.totalorder %s31, 1
      %s33 = scalar_select %p32, 0, %s31
      %s34 = sadd.s32 1, %s25
      %s35 = scalar_select %p32, %s34, %s25
      %p36 = scmp.ge.s32.totalorder %s35, 2
      %s37 = scalar_select %p36, 0, %s35
      %s38 = ssub.s32 %s25, %s37
      %s39 = ssub.s32 %s26, %s33
      %s40 = sor.u32 %s38, %s39
      %p41 = scmp.eq.s32.totalorder %s40, 0
      %s43 = sadd.s32 %s42, 1
      %s44 = scalar_select %p41, %s42, %s43
      %p47 = pneg %p41
      %p48 = scmp.eq.s32.totalorder %s18, 1
      %p49 = por %p47, %p48
      %p50 = scmp.ne.s32.totalorder %s42, %s45
      %p51 = scmp.eq.s32.totalorder %s18, 0
      %p52 = por %p50, %p51
      %p53 = scmp.ne.s32.totalorder %s42, %s45
      %p54 = scmp.eq.s32.totalorder %s23, 1
      %p55 = por %p53, %p54
      %p56 = scmp.ne.s32.totalorder %s45, %s46
      %p57 = scmp.eq.s32.totalorder %s23, 0
      %p58 = por %p56, %p57
      %p59 = scmp.ne.s32.totalorder %s45, %s46
      %p60 = scmp.eq.s32.totalorder %s24, 1
      %p61 = por %p59, %p60
      %p63 = scmp.ne.s32.totalorder %s46, %s62
      %p64 = scmp.eq.s32.totalorder %s24, 0
      %p65 = por %p63, %p64
      %s67 = sadd.s32 %s66, 1
      %p70 = scmp.eq.s32.totalorder %s18, 1
      %p71 = scmp.ne.s32.totalorder %s66, %s68
      %p72 = scmp.eq.s32.totalorder %s18, 0
      %p73 = por %p71, %p72
      %p74 = scmp.ne.s32.totalorder %s66, %s68
      %p75 = scmp.eq.s32.totalorder %s23, 1
      %p76 = por %p74, %p75
      %p77 = scmp.ne.s32.totalorder %s68, %s69
      %p78 = scmp.eq.s32.totalorder %s23, 0
      %p79 = por %p77, %p78
      %p80 = scmp.ne.s32.totalorder %s68, %s69
      %p81 = scmp.eq.s32.totalorder %s24, 1
      %p82 = por %p80, %p81
      %p84 = scmp.ne.s32.totalorder %s69, %s83
      %p85 = scmp.eq.s32.totalorder %s24, 0
      %p86 = por %p84, %p85
      %s88 = sadd.s32 %s87, 1
      %p91 = scmp.eq.s32.totalorder %s18, 1
      %p92 = scmp.ne.s32.totalorder %s87, %s89
      %p93 = scmp.eq.s32.totalorder %s18, 0
      %p94 = por %p92, %p93
      %p95 = scmp.ne.s32.totalorder %s87, %s89
      %p96 = scmp.eq.s32.totalorder %s23, 1
      %p97 = por %p95, %p96
      %p98 = scmp.ne.s32.totalorder %s89, %s90
      %p99 = scmp.eq.s32.totalorder %s23, 0
      %p100 = por %p98, %p99
      %p101 = scmp.ne.s32.totalorder %s89, %s90
      %p102 = scmp.eq.s32.totalorder %s24, 1
      %p103 = por %p101, %p102
      %p105 = scmp.ne.s32.totalorder %s90, %s104
      %p106 = scmp.eq.s32.totalorder %s24, 0
      %p107 = por %p105, %p106
      %s109 = sadd.s32 %s108, 1
      %p112 = scmp.eq.s32.totalorder %s18, 1
      %p113 = scmp.ne.s32.totalorder %s108, %s110
      %p114 = scmp.eq.s32.totalorder %s18, 0
      %p115 = por %p113, %p114
      %p116 = scmp.ne.s32.totalorder %s108, %s110
      %p117 = scmp.eq.s32.totalorder %s23, 1
      %p118 = por %p116, %p117
      %p119 = scmp.ne.s32.totalorder %s110, %s111
      %p120 = scmp.eq.s32.totalorder %s23, 0
      %p121 = por %p119, %p120
      %p122 = scmp.ne.s32.totalorder %s110, %s111
      %p123 = scmp.eq.s32.totalorder %s24, 1
      %p124 = por %p122, %p123
      %p126 = scmp.ne.s32.totalorder %s111, %s125
      %p127 = scmp.eq.s32.totalorder %s24, 0
      %p128 = por %p126, %p127
      %s129 = ssub.s32 %s25, %s37
      %s130 = ssub.s32 %s26, %s33
      %s131 = sor.u32 %s129, %s130
      %p132 = scmp.eq.s32.totalorder %s131, 0
      %s134 = sadd.s32 %s133, 1
      %s135 = scalar_select %p132, %s133, %s134
      %p138 = pneg %p132
      %p139 = scmp.eq.s32.totalorder %s18, 1
      %p140 = por %p138, %p139
      %p141 = scmp.ne.s32.totalorder %s133, %s136
      %p142 = scmp.eq.s32.totalorder %s18, 0
      %p143 = por %p141, %p142
      %p144 = scmp.ne.s32.totalorder %s133, %s136
      %p145 = scmp.eq.s32.totalorder %s23, 1
      %p146 = por %p144, %p145
      %p147 = scmp.ne.s32.totalorder %s136, %s137
      %p148 = scmp.eq.s32.totalorder %s23, 0
      %p149 = por %p147, %p148
      %p150 = scmp.ne.s32.totalorder %s136, %s137
      %p151 = scmp.eq.s32.totalorder %s24, 1
      %p152 = por %p150, %p151
      %p154 = scmp.ne.s32.totalorder %s137, %s153
      %p155 = scmp.eq.s32.totalorder %s24, 0
      %p156 = por %p154, %p155
      %p157 = scmp.le.s32.totalorder 1, %s18
      %p158 = scmp.lt.s32.totalorder %s18, 3
      %p159 = pnand %p157, %p158
      %p160 = pneg %p159
      // Predicated region
      $region9: #{tpu_custom_call.1} parent=5 // pred_check
        _
      $region10: #{tpu_custom_call.1} parent=5 // pred_check_branch
        %162 = sbr.rel (%p159) target = $region12
      $region11: #{tpu_custom_call.1} parent=5 // pred_region
        %s163 = ssub.s32 %s18, 1
        // Predicated region
        $region13: #{tpu_custom_call.1} parent=11 // pred_check
          %p164 = pneg %p79
        $region14: #{tpu_custom_call.1} parent=11 // pred_check_branch
          %166 = sbr.rel (%p164) target = $region16
        $region15: #{tpu_custom_call.1} parent=11 // pred_region
          %s168 = ssub.s32 16, 16
          %169 = vsyncadd [#allocation6], %s168
          %s171 = sshll.u32 [#allocation5], 4
          %s172 = int_to_ptr.vmem [resolvable:$true] %s171
          %174 = dma.hbm_to_vmem [thread:$0]  %s1, 16, %s172, [#allocation6]
        $region16: #{tpu_custom_call.1} parent=11 // pred_fallthru
          _
        // Predicated region
        $region17: #{tpu_custom_call.1} parent=11 // pred_check
          %p175 = pneg %p100
        $region18: #{tpu_custom_call.1} parent=11 // pred_check_branch
          %177 = sbr.rel (%p175) target = $region20
        $region19: #{tpu_custom_call.1} parent=11 // pred_region
          %s179 = ssub.s32 16, 16
          %180 = vsyncadd [#allocation6], %s179
          %s182 = sshll.u32 [#allocation7], 4
          %s183 = int_to_ptr.vmem [resolvable:$true] %s182
          %185 = dma.hbm_to_vmem [thread:$0]  %s2, 16, %s183, [#allocation6]
        $region20: #{tpu_custom_call.1} parent=11 // pred_fallthru
          _
        // Predicated region
        $region21: #{tpu_custom_call.1} parent=11 // pred_check
          %p186 = pneg %p121
        $region22: #{tpu_custom_call.1} parent=11 // pred_check_branch
          %188 = sbr.rel (%p186) target = $region24
        $region23: #{tpu_custom_call.1} parent=11 // pred_region
          %s190 = ssub.s32 64, 64
          %191 = vsyncadd [#allocation9], %s190
          %s193 = sshll.u32 [#allocation8], 4
          %s194 = int_to_ptr.vmem [resolvable:$true] %s193
          %196 = dma.hbm_to_vmem [thread:$0]  %s3, 64, %s194, [#allocation9]
        $region24: #{tpu_custom_call.1} parent=11 // pred_fallthru
          _
      $region12: #{tpu_custom_call.1} parent=5 // pred_fallthru
        _
      %p197 = scmp.lt.s32.totalorder %s18, 2
      // Predicated region
      $region25: #{tpu_custom_call.1} parent=5 // pred_check
        %p198 = pneg %p197
      $region26: #{tpu_custom_call.1} parent=5 // pred_check_branch
        %200 = sbr.rel (%p198) target = $region28
      $region27: #{tpu_custom_call.1} parent=5 // pred_region
        // Predicated region
        $region29: #{tpu_custom_call.1} parent=27 // pred_check
          %p201 = pneg %p52
        $region30: #{tpu_custom_call.1} parent=27 // pred_check_branch
          %203 = sbr.rel (%p201) target = $region32
        $region31: #{tpu_custom_call.1} parent=27 // pred_region
          %s204 = sand.u32 %s42, 1
          %s205 = scalar_lea.sflag [#allocation3], %s204
          %s206 = sand.u32 %s42, 1
          %s207 = smul.addr %s206, 128
          %s208 = scalar_lea.vmem [#allocation2], %s207
          %s209 = smul.u32 16, %s26
          %s211 = ssub.s32 2048, 2048
          %212 = vsyncadd %s205, %s211
          %s213 = smul.addr %s25, 16
          %s214 = sadd.s32 %s209, %s213
          %s215 = smul.addr %s214, 128
          %s216 = scalar_lea.hbm %s0, %s215
          %s217 = sshll.u32 %s208, 4
          %s218 = int_to_ptr.vmem [resolvable:$true] %s217
          %223 = dma.hbm_to_vmem [thread:$0]  %s216, 2048, %s218, %s205, 128, 128, 8
        $region32: #{tpu_custom_call.1} parent=27 // pred_fallthru
          _
      $region28: #{tpu_custom_call.1} parent=5 // pred_fallthru
        _
      %p224 = scmp.le.s32.totalorder 1, %s18
      %p225 = scmp.lt.s32.totalorder %s18, 3
      %p226 = pnand %p224, %p225
      %p227 = pneg %p226
      // Predicated region
      $region33: #{tpu_custom_call.1} parent=5 // pred_check
        _
      $region34: #{tpu_custom_call.1} parent=5 // pred_check_branch
        %229 = sbr.rel (%p226) target = $region36
      $region35: #{tpu_custom_call.1} parent=5 // pred_region
        %s230 = ssub.s32 %s18, 1
        %s231 = sand.u32 %s45, 1
        %s232 = scalar_lea.sflag [#allocation3], %s231
        %s233 = sand.u32 %s45, 1
        %s234 = smul.addr %s233, 128
        %s235 = scalar_lea.vmem [#allocation2], %s234
        // Predicated region
        $region37: #{tpu_custom_call.1} parent=35 // pred_check
          %p236 = pneg %p58
        $region38: #{tpu_custom_call.1} parent=35 // pred_check_branch
          %238 = sbr.rel (%p236) target = $region40
        $region39: #{tpu_custom_call.1} parent=35 // pred_region
          %239 = dma.done %s232, 2048
        $region40: #{tpu_custom_call.1} parent=35 // pred_fallthru
          _
        // Predicated region
        $region41: #{tpu_custom_call.1} parent=35 // pred_check
          %p240 = pneg %p79
        $region42: #{tpu_custom_call.1} parent=35 // pred_check_branch
          %242 = sbr.rel (%p240) target = $region44
        $region43: #{tpu_custom_call.1} parent=35 // pred_region
          %243 = dma.done [#allocation6], 16
        $region44: #{tpu_custom_call.1} parent=35 // pred_fallthru
          _
        // Predicated region
        $region45: #{tpu_custom_call.1} parent=35 // pred_check
          %p244 = pneg %p100
        $region46: #{tpu_custom_call.1} parent=35 // pred_check_branch
          %246 = sbr.rel (%p244) target = $region48
        $region47: #{tpu_custom_call.1} parent=35 // pred_region
          %247 = dma.done [#allocation6], 16
        $region48: #{tpu_custom_call.1} parent=35 // pred_fallthru
          _
        // Predicated region
        $region49: #{tpu_custom_call.1} parent=35 // pred_check
          %p248 = pneg %p121
        $region50: #{tpu_custom_call.1} parent=35 // pred_check_branch
          %250 = sbr.rel (%p248) target = $region52
        $region51: #{tpu_custom_call.1} parent=35 // pred_region
          %251 = dma.done [#allocation9], 64
        $region52: #{tpu_custom_call.1} parent=35 // pred_fallthru
          _
        %s252 = sand.u32 %s45, 1
        %s253 = scalar_lea.sflag [#allocation3], %s252
        %s254 = sand.u32 %s45, 1
        %s255 = smul.addr %s254, 128
        %s256 = scalar_lea.vmem [#allocation2], %s255
        %p257 = pneg %p58
        %p258 = pneg %p55
        %p259 = pneg %p79
        %p260 = pneg %p76
        %p261 = pneg %p100
        %p262 = pneg %p97
        %p263 = pneg %p121
        %p264 = pneg %p118
        %p265 = pneg %p149
        %p266 = pneg %p146
        %s267 = sand.u32 %s136, 1
        %s268 = scalar_lea.sflag [#allocation4], %s267
        %s269 = sand.u32 %s136, 1
        %s270 = smul.addr %s269, 64
        %s271 = scalar_lea.vmem [#allocation10], %s270
        %s272 = smul.u32 16, %s28
        %s273 = smul.u32 8, %s28
        %v275 = vld [vmem:[%s235] sm:$0xff]
        %v276 = vld [vmem:[%s235 + $0x8] sm:$0xff]
        %v277 = vld [vmem:[%s235 + $0x10] sm:$0xff]
        %v278 = vld [vmem:[%s235 + $0x18] sm:$0xff]
        %v279 = vld [vmem:[%s235 + $0x20] sm:$0xff]
        %v280 = vld [vmem:[%s235 + $0x28] sm:$0xff]
        %v281 = vld [vmem:[%s235 + $0x30] sm:$0xff]
        %v282 = vld [vmem:[%s235 + $0x38] sm:$0xff]
        %v283 = vld [vmem:[%s235 + $0x40] sm:$0xff]
        %v284 = vld [vmem:[%s235 + $0x48] sm:$0xff]
        %v285 = vld [vmem:[%s235 + $0x50] sm:$0xff]
        %v286 = vld [vmem:[%s235 + $0x58] sm:$0xff]
        %v287 = vld [vmem:[%s235 + $0x60] sm:$0xff]
        %v288 = vld [vmem:[%s235 + $0x68] sm:$0xff]
        %v289 = vld [vmem:[%s235 + $0x70] sm:$0xff]
        %v290 = vld [vmem:[%s235 + $0x78] sm:$0xff]
        %v291 = vld [vmem:[#allocation5] sm:$0x1]
        %v293 = vlaneseq
        %v294 = vshrl.u32 %v293, 7
        %v295 = vsub.s32 0, %v294
        %v296 = vrot.slane %v291, %v295
        %v298 = vmul.f32 %v275, %v296
        %v299 = vmul.f32 %v276, %v296
        %v300 = vmul.f32 %v277, %v296
        %v301 = vmul.f32 %v278, %v296
        %v302 = vmul.f32 %v279, %v296
        %v303 = vmul.f32 %v280, %v296
        %v304 = vmul.f32 %v281, %v296
        %v305 = vmul.f32 %v282, %v296
        %v306 = vmul.f32 %v283, %v296
        %v307 = vmul.f32 %v284, %v296
        %v308 = vmul.f32 %v285, %v296
        %v309 = vmul.f32 %v286, %v296
        %v310 = vmul.f32 %v287, %v296
        %v311 = vmul.f32 %v288, %v296
        %v312 = vmul.f32 %v289, %v296
        %v313 = vmul.f32 %v290, %v296
        %v314 = vld [vmem:[#allocation7] sm:$0x1]
        %v316 = vlaneseq
        %v317 = vshrl.u32 %v316, 7
        %v318 = vsub.s32 0, %v317
        %v319 = vrot.slane %v314, %v318
        %v321 = vadd.f32 %v298, %v319
        %v322 = vadd.f32 %v299, %v319
        %v323 = vadd.f32 %v300, %v319
        %v324 = vadd.f32 %v301, %v319
        %v325 = vadd.f32 %v302, %v319
        %v326 = vadd.f32 %v303, %v319
        %v327 = vadd.f32 %v304, %v319
        %v328 = vadd.f32 %v305, %v319
        %v329 = vadd.f32 %v306, %v319
        %v330 = vadd.f32 %v307, %v319
        %v331 = vadd.f32 %v308, %v319
        %v332 = vadd.f32 %v309, %v319
        %v333 = vadd.f32 %v310, %v319
        %v334 = vadd.f32 %v311, %v319
        %v335 = vadd.f32 %v312, %v319
        %v336 = vadd.f32 %v313, %v319
        %v337 = vmax.f32 %v321, 0.0
        %v338 = vmax.f32 %v322, 0.0
        %v339 = vmax.f32 %v323, 0.0
        %v340 = vmax.f32 %v324, 0.0
        %v341 = vmax.f32 %v325, 0.0
        %v342 = vmax.f32 %v326, 0.0
        %v343 = vmax.f32 %v327, 0.0
        %v344 = vmax.f32 %v328, 0.0
        %v345 = vmax.f32 %v329, 0.0
        %v346 = vmax.f32 %v330, 0.0
        %v347 = vmax.f32 %v331, 0.0
        %v348 = vmax.f32 %v332, 0.0
        %v349 = vmax.f32 %v333, 0.0
        %v350 = vmax.f32 %v334, 0.0
        %v351 = vmax.f32 %v335, 0.0
        %v352 = vmax.f32 %v336, 0.0
        %v353 = vadd.f32 %v337, %v338
        %v354 = vadd.f32 %v339, %v340
        %v355 = vadd.f32 %v341, %v342
        %v356 = vadd.f32 %v343, %v344
        %v357 = vadd.f32 %v345, %v346
        %v358 = vadd.f32 %v347, %v348
        %v359 = vadd.f32 %v349, %v350
        %v360 = vadd.f32 %v351, %v352
        %v361 = vpack.c.bf16 %v354, %v353
        %v362 = vpack.c.bf16 %v356, %v355
        %v363 = vpack.c.bf16 %v358, %v357
        %v364 = vpack.c.bf16 %v360, %v359
        %v365 = vld [vmem:[#allocation8] sm:$0xf]
        %vm366 = vcmask 64512
        %v368 = vsel %vm366, %v361, 0
        %v371 = vsel %vm366, %v362, 0
        %v374 = vsel %vm366, %v363, 0
        %v377 = vsel %vm366, %v364, 0
        %vm379 = vcmask 1043456
        %v381 = vsel %vm379, %v365, 0
        %383 = vmatprep.subr.bf16.mxu0 0
        %384 = vmatpush1.bf16.msra.mxu0 %v381
        %385 = vmatprep.subr.bf16.mxu0 0
        %386 = vmatpush1.bf16.msra.mxu0 0
        %387 = vmatprep.subr.bf16.mxu0 0
        %388 = vmatpush1.bf16.msra.mxu0 0
        %389 = vmatprep.subr.bf16.mxu0 0
        %390 = vmatpush1.bf16.msra.mxu0 0
        %391 = vmatprep.subr.bf16.mxu0 0
        %392 = vmatpush1.bf16.msra.mxu0 0
        %393 = vmatprep.subr.bf16.mxu0 0
        %394 = vmatpush1.bf16.msra.mxu0 0
        %395 = vmatprep.subr.bf16.mxu0 0
        %396 = vmatpush1.bf16.msra.mxu0 0
        %397 = vmatprep.subr.bf16.mxu0 0
        %398 = vmatpush1.bf16.msra.mxu0 0
        %399 = vmatprep.subr.bf16.mxu0 0
        %400 = vmatpush1.bf16.msra.mxu0 0
        %401 = vmatprep.subr.bf16.mxu0 0
        %402 = vmatpush1.bf16.msra.mxu0 0
        %403 = vmatprep.subr.bf16.mxu0 0
        %404 = vmatpush1.bf16.msra.mxu0 0
        %405 = vmatprep.subr.bf16.mxu0 0
        %406 = vmatpush1.bf16.msra.mxu0 0
        %407 = vmatprep.subr.bf16.mxu0 0
        %408 = vmatpush1.bf16.msra.mxu0 0
        %409 = vmatprep.subr.bf16.mxu0 0
        %410 = vmatpush1.bf16.msra.mxu0 0
        %411 = vmatprep.subr.bf16.mxu0 0
        %412 = vmatpush1.bf16.msra.mxu0 0
        %413 = vmatprep.subr.bf16.mxu0 0
        %414 = vmatpush1.bf16.msra.mxu0 0
        %415 = vmatprep.mubr.bf16.mxu0 0
        %416 = vmatmul.mubr.bf16.gmra.mrb[0].mxu0 %v368
        %v417 = vpop.f32.mrb[0].mxu0
        %v418 = vadd.f32 0.0, %v417
        %v419 = vpop.f32.mrb[0].mxu0
        %v420 = vpop.f32.mrb[0].mxu0
        %v421 = vadd.f32 0.0, %v420
        %v422 = vpop.f32.mrb[0].mxu0
        %423 = vmatprep.mubr.bf16.mxu0 0
        %424 = vmatmul.mubr.bf16.gmra.mrb[0].mxu0 %v371
        %v425 = vpop.f32.mrb[0].mxu0
        %v426 = vadd.f32 0.0, %v425
        %v427 = vpop.f32.mrb[0].mxu0
        %v428 = vpop.f32.mrb[0].mxu0
        %v429 = vadd.f32 0.0, %v428
        %v430 = vpop.f32.mrb[0].mxu0
        %431 = vmatprep.mubr.bf16.mxu0 0
        %432 = vmatmul.mubr.bf16.gmra.mrb[0].mxu0 %v374
        %v433 = vpop.f32.mrb[0].mxu0
        %v434 = vadd.f32 0.0, %v433
        %v435 = vpop.f32.mrb[0].mxu0
        %v436 = vpop.f32.mrb[0].mxu0
        %v437 = vadd.f32 0.0, %v436
        %v438 = vpop.f32.mrb[0].mxu0
        %439 = vmatprep.mubr.bf16.mxu0 0
        %440 = vmatmul.mubr.bf16.gmra.mrb[0].mxu0 %v377
        %v441 = vpop.f32.mrb[0].mxu0
        %v442 = vadd.f32 0.0, %v441
        %v443 = vpop.f32.mrb[0].mxu0
        %v444 = vpop.f32.mrb[0].mxu0
        %v445 = vadd.f32 0.0, %v444
        %v446 = vpop.f32.mrb[0].mxu0
        %447 = vdwg.mxu0
        %vm448 = vcmask 15360
        %449 = vst.msk [vmem:[%s271] sm:$0xff] %vm448, %v418
        %450 = vst.msk [vmem:[%s271 + $0x8] sm:$0xff] %vm448, %v421
        %451 = vst.msk [vmem:[%s271 + $0x10] sm:$0xff] %vm448, %v426
        %452 = vst.msk [vmem:[%s271 + $0x18] sm:$0xff] %vm448, %v429
        %453 = vst.msk [vmem:[%s271 + $0x20] sm:$0xff] %vm448, %v434
        %454 = vst.msk [vmem:[%s271 + $0x28] sm:$0xff] %vm448, %v437
        %455 = vst.msk [vmem:[%s271 + $0x30] sm:$0xff] %vm448, %v442
        %456 = vst.msk [vmem:[%s271 + $0x38] sm:$0xff] %vm448, %v445
        %s457 = sand.u32 %s136, 1
        %s458 = scalar_lea.sflag [#allocation4], %s457
        %s459 = sand.u32 %s136, 1
        %s460 = smul.addr %s459, 64
        %s461 = scalar_lea.vmem [#allocation10], %s460
        // Predicated region
        $region53: #{tpu_custom_call.1} parent=35 // pred_check
          %p462 = pneg %p146
        $region54: #{tpu_custom_call.1} parent=35 // pred_check_branch
          %464 = sbr.rel (%p462) target = $region56
        $region55: #{tpu_custom_call.1} parent=35 // pred_region
          %s465 = smul.u32 8, %s28
          %s467 = ssub.s32 1024, 1024
          %468 = vsyncadd %s458, %s467
          %s469 = smul.addr %s27, 8
          %s470 = sadd.s32 %s465, %s469
          %s471 = smul.addr %s470, 128
          %s472 = scalar_lea.hbm %s4, %s471
          %s473 = sshll.u32 %s461, 4
          %s474 = int_to_ptr.vmem [resolvable:$true] %s473
          %479 = dma.vmem_to_hbm [thread:$0]  %s474, 1024, %s472, %s458, 128, 128, 8
        $region56: #{tpu_custom_call.1} parent=35 // pred_fallthru
          _
      $region36: #{tpu_custom_call.1} parent=5 // pred_fallthru
        _
      %p480 = scmp.le.s32.totalorder 2, %s18
      // Predicated region
      $region57: #{tpu_custom_call.1} parent=5 // pred_check
        %p481 = pneg %p480
      $region58: #{tpu_custom_call.1} parent=5 // pred_check_branch
        %483 = sbr.rel (%p481) target = $region60
      $region59: #{tpu_custom_call.1} parent=5 // pred_region
        %s484 = ssub.s32 %s18, 2
        // Predicated region
        $region61: #{tpu_custom_call.1} parent=59 // pred_check
          %p485 = pneg %p152
        $region62: #{tpu_custom_call.1} parent=59 // pred_check_branch
          %487 = sbr.rel (%p485) target = $region64
        $region63: #{tpu_custom_call.1} parent=59 // pred_region
          %s488 = sand.u32 %s137, 1
          %s489 = scalar_lea.sflag [#allocation4], %s488
          %s490 = sand.u32 %s137, 1
          %s491 = smul.addr %s490, 64
          %s492 = scalar_lea.vmem [#allocation10], %s491
          %493 = dma.done %s489, 1024
        $region64: #{tpu_custom_call.1} parent=59 // pred_fallthru
          _
      $region60: #{tpu_custom_call.1} parent=5 // pred_fallthru
        _
    $region6: #{tpu_custom_call.1} parent=1 // loop_footer
      %s22 = sadd.s32 1, %s18
    $region7: #{tpu_custom_call.1} parent=1 // loop_footer_branch
      %17 = sbr.rel target = $region3
    $region8: #{tpu_custom_call.1} parent=1 // loop_exit
      _
    %494 = vsyncpa [#allocation3], 1
    %s495 = scalar_lea.sflag [#allocation3], 1
    %496 = vsyncpa %s495, 1
    %497 = vsyncpa [#allocation6], 1
    %498 = vsyncpa [#allocation9], 1
    %499 = vsyncpa [#allocation4], 1
    %s500 = scalar_lea.sflag [#allocation4], 1
    %501 = vsyncpa %s500, 1

</llo_original>
